<compile_context>
chip_gen: v7x
topology: tpu7x:2x2x1
jax: 0.10.0
libtpu: 0.0.40
codegen_flags: <defaults>
</compile_context>

<pallas_src>
import functools

import jax
import jax.numpy as jnp
from jax.experimental import pallas as pl
from jax.experimental.pallas import tpu as pltpu


# ----------------------------- Pallas kernel --------------------------------

def _moe_conv_kernel(patches_ref, w_ref, b_ref, gate_ref, out_ref):
    # patches_ref: (1, K_pad, TP)      bf16   im2col patches tile (K x spatial)
    # w_ref:       (C_out_pad, K_pad)  bf16   reshaped conv weight (resident)
    # b_ref:       (C_out_pad, 1)      f32    conv bias (resident)
    # gate_ref:    (1, C_out_pad, 1)   f32    gate per (batch, out_channel)
    # out_ref:     (1, C_out_pad, TP)
    acc = jnp.dot(w_ref[...], patches_ref[0],
                  preferred_element_type=jnp.float32)     # (C_out_pad, TP), MXU
    acc = acc + b_ref[...]                                 # bias (lane broadcast)
    acc = acc * gate_ref[0]                                # per-channel gate
    out_ref[0] = acc.astype(out_ref.dtype)                 # lane-dense store


# ----------------------------- im2col (K x P layout) ------------------------

def _im2col_kp(x, kernel_size, stride, padding, dilation):
    """x: (N, C_in, H, W) -> patches (N, C_in*KH*KW, OH*OW), plus (OH, OW).

    K axis is ordered (c_in, kh, kw) to match weight.reshape(C_out, K).
    """
    n, c_in, h, w = x.shape
    kh, kw = kernel_size
    oh = (h + 2 * padding - dilation * (kh - 1) - 1) // stride + 1
    ow = (w + 2 * padding - dilation * (kw - 1) - 1) // stride + 1
    x_pad = jnp.pad(x, ((0, 0), (0, 0), (padding, padding), (padding, padding)))
    slices = []
    for i in range(kh):
        for j in range(kw):
            hs = i * dilation
            ws = j * dilation
            sl = x_pad[:, :, hs:hs + (oh - 1) * stride + 1:stride,
                             ws:ws + (ow - 1) * stride + 1:stride]  # (N, C_in, OH, OW)
            slices.append(sl)
    # (N, C_in, KH*KW, OH, OW) -> (N, K, P); no transpose needed in this layout.
    patches = jnp.stack(slices, axis=2)
    patches = patches.reshape(n, c_in * kh * kw, oh * ow)
    return patches, oh, ow


def _round_up(v, m):
    return ((v + m - 1) // m) * m


# ----------------------------- wrapper ---------------------------------------

@functools.partial(jax.jit, static_argnames=("stride", "padding", "dilation"))
def moe_layer_forward(x, gate_values, weight, bias, *, stride=1, padding=0, dilation=1):
    """Pallas implementation of MoELayer.forward.

    x:           (N, C_in, H, W)   float32 (NCHW, matching PyTorch)
    gate_values: (N, C_out)        float32
    weight:      (C_out, C_in, KH, KW)
    bias:        (C_out,)
    returns:     (N, C_out, OH, OW)
    """
    n, c_in, h, w = x.shape
    c_out, _, kh, kw = weight.shape

    patches, oh, ow = _im2col_kp(x, (kh, kw), stride, padding, dilation)
    p = oh * ow
    k = c_in * kh * kw

    # ---- padding to TPU-friendly sizes ----
    k_pad = _round_up(k, 128)                   # contraction dim -> multiple of 128
    c_out_pad = _round_up(c_out, 8)             # sublane dim -> multiple of 8
    p128 = _round_up(p, 128)
    tp = min(512, p128)                         # spatial tile (multiple of 128)
    p_pad = _round_up(p, tp)
    n_pt = p_pad // tp

    # Patches: (N, K_pad, P_pad), bf16 (MXU-native operands, halves DMA bytes).
    patches_p = jnp.pad(patches, ((0, 0), (0, k_pad - k), (0, p_pad - p)))
    patches_p = patches_p.astype(jnp.bfloat16)

    # Weight: (C_out_pad, K_pad), bf16. Bias/gate stay f32.
    w_mat = weight.reshape(c_out, k)
    w_mat = jnp.pad(w_mat, ((0, c_out_pad - c_out), (0, k_pad - k))).astype(jnp.bfloat16)
    b_mat = jnp.pad(bias, (0, c_out_pad - c_out)).reshape(c_out_pad, 1).astype(jnp.float32)
    gate = jnp.pad(gate_values, ((0, 0), (0, c_out_pad - c_out)))
    gate = gate.reshape(n, c_out_pad, 1).astype(jnp.float32)

    out_flat = pl.pallas_call(
        _moe_conv_kernel,
        out_shape=jax.ShapeDtypeStruct((n, c_out_pad, p_pad), x.dtype),
        grid=(n, n_pt),
        in_specs=[
            # patches tile moves per (batch, spatial-tile)
            pl.BlockSpec((1, k_pad, tp), lambda b, pt: (b, 0, pt)),
            # weight: DMA'd once, VMEM-resident across the whole grid
            pl.BlockSpec((c_out_pad, k_pad), lambda b, pt: (0, 0)),
            # bias: resident
            pl.BlockSpec((c_out_pad, 1), lambda b, pt: (0, 0)),
            # gate: depends only on batch -> resident across spatial tiles
            pl.BlockSpec((1, c_out_pad, 1), lambda b, pt: (b, 0, 0)),
        ],
        out_specs=pl.BlockSpec((1, c_out_pad, tp), lambda b, pt: (b, 0, pt)),
        compiler_params=pltpu.CompilerParams(
            dimension_semantics=("parallel", "parallel"),
            vmem_limit_bytes=32 * 1024 * 1024,
        ),
    )(patches_p, w_mat, b_mat, gate)

    # (N, C_out_pad, P_pad) -> slice padding -> (N, C_out, OH, OW); no transpose.
    out = out_flat[:, :c_out, :p].reshape(n, c_out, oh, ow)
    return out


# ----------------------------- reference (plain JAX) ------------------------

def moe_layer_reference(x, gate_values, weight, bias, *, stride=1, padding=0, dilation=1):
    out = jax.lax.conv_general_dilated(
        x, weight,
        window_strides=(stride, stride),
        padding=[(padding, padding), (padding, padding)],
        rhs_dilation=(dilation, dilation),
        dimension_numbers=("NCHW", "OIHW", "NCHW"),
    )
    out = out + bias.reshape(1, -1, 1, 1)
    return out * gate_values.reshape(gate_values.shape[0], -1, 1, 1)


# ----------------------------------- main ------------------------------------

if __name__ == "__main__":
    # Small, deterministic shapes.
    N, C_IN, H, W = 2, 4, 16, 16
    C_OUT, KS = 8, 3
    STRIDE, PADDING, DILATION = 1, 1, 1

    key = jax.random.PRNGKey(0)
    kx, kg, kw_, kb = jax.random.split(key, 4)

    x = jax.random.normal(kx, (N, C_IN, H, W), dtype=jnp.float32)
    gate_values = jax.random.uniform(kg, (N, C_OUT), dtype=jnp.float32)

    # Deterministic Conv2d parameter init (kaiming-uniform-like bound, PyTorch default).
    fan_in = C_IN * KS * KS
    bound = 1.0 / (fan_in ** 0.5)
    weight = jax.random.uniform(kw_, (C_OUT, C_IN, KS, KS),
                                minval=-bound, maxval=bound, dtype=jnp.float32)
    bias = jax.random.uniform(kb, (C_OUT,), minval=-bound, maxval=bound,
                              dtype=jnp.float32)

    out = moe_layer_forward(x, gate_values, weight, bias,
                            stride=STRIDE, padding=PADDING, dilation=DILATION)
    out = jax.block_until_ready(out)

    ref = moe_layer_reference(x, gate_values, weight, bias,
                              stride=STRIDE, padding=PADDING, dilation=DILATION)
    ref = jax.block_until_ready(ref)

    assert out.shape == ref.shape == (N, C_OUT, H, W), (out.shape, ref.shape)
    # bf16 MXU operands with f32 accumulation -> relaxed tolerance vs f32 reference.
    max_err = float(jnp.max(jnp.abs(out - ref)))
    assert jnp.allclose(out, ref, atol=3e-2, rtol=3e-2), max_err
    print("KERNEL_OK")
</pallas_src>

<mosaic_0001>
module attributes {stable_mosaic.version = 11 : i64} {
  func.func @_moe_conv_kernel(%arg0: i32, %arg1: i32, %arg2: memref<1x128x256xbf16, #tpu.memory_space<vmem>>, %arg3: memref<8x128xbf16, #tpu.memory_space<vmem>>, %arg4: memref<8x1xf32, #tpu.memory_space<vmem>>, %arg5: memref<1x8x1xf32, #tpu.memory_space<vmem>>, %arg6: memref<1x8x256xf32, #tpu.memory_space<vmem>>) attributes {dimension_semantics = [#tpu.dimension_semantics<parallel>, #tpu.dimension_semantics<parallel>], iteration_bounds = array<i64: 2, 1>, scalar_prefetch = 0 : i64, scratch_operands = 0 : i64, tpu.core_type = #tpu.core_type<tc>, window_params = [{transform_indices = @transform_0, window_bounds = array<i64: 1, 128, 256>}, {pipeline_mode = #tpu.pipeline_mode<synchronous>, transform_indices = @transform_1, window_bounds = array<i64: 8, 128>}, {pipeline_mode = #tpu.pipeline_mode<synchronous>, transform_indices = @transform_2, window_bounds = array<i64: 8, 1>}, {transform_indices = @transform_3, window_bounds = array<i64: 1, 8, 1>}, {transform_indices = @transform_4, window_bounds = array<i64: 1, 8, 256>}]} {
    %c0 = arith.constant 0 : index
    %c0_0 = arith.constant 0 : index
    %0 = vector.load %arg3[%c0, %c0_0] : memref<8x128xbf16, #tpu.memory_space<vmem>>, vector<8x128xbf16>
    %c0_1 = arith.constant 0 : index
    %c0_2 = arith.constant 0 : index
    %c0_3 = arith.constant 0 : index
    %1 = vector.load %arg2[%c0_1, %c0_2, %c0_3] : memref<1x128x256xbf16, #tpu.memory_space<vmem>>, vector<1x128x256xbf16>
    %2 = vector.shape_cast %1 : vector<1x128x256xbf16> to vector<128x256xbf16>
    %cst = arith.constant dense<0.000000e+00> : vector<8x256xf32>
    %3 = tpu.matmul %0, %2, %cst {dimension_numbers = #tpu.dot_dimension_numbers<[1], [0], [0], [1], [0, 0, 1, 1], [], []>} : vector<8x128xbf16>, vector<128x256xbf16>, vector<8x256xf32> -> vector<8x256xf32>
    %c0_4 = arith.constant 0 : index
    %c0_5 = arith.constant 0 : index
    %4 = vector.load %arg4[%c0_4, %c0_5] : memref<8x1xf32, #tpu.memory_space<vmem>>, vector<8x1xf32>
    %5 = vector.broadcast %4 : vector<8x1xf32> to vector<8x256xf32>
    %6 = arith.addf %3, %5 : vector<8x256xf32>
    %c0_6 = arith.constant 0 : index
    %c0_7 = arith.constant 0 : index
    %c0_8 = arith.constant 0 : index
    %7 = vector.load %arg5[%c0_6, %c0_7, %c0_8] : memref<1x8x1xf32, #tpu.memory_space<vmem>>, vector<1x8x1xf32>
    %8 = vector.shape_cast %7 : vector<1x8x1xf32> to vector<8x1xf32>
    %9 = vector.broadcast %8 : vector<8x1xf32> to vector<8x256xf32>
    %10 = arith.mulf %6, %9 : vector<8x256xf32>
    %c0_9 = arith.constant 0 : index
    %c0_10 = arith.constant 0 : index
    %c0_11 = arith.constant 0 : index
    %11 = vector.load %arg6[%c0_9, %c0_10, %c0_11] : memref<1x8x256xf32, #tpu.memory_space<vmem>>, vector<1x8x256xf32>
    %12 = vector.shape_cast %11 : vector<1x8x256xf32> to vector<8x256xf32>
    %13 = vector.shape_cast %10 : vector<8x256xf32> to vector<1x8x256xf32>
    tpu.vector_store %arg6[%c0_9, %c0_10, %c0_11], %13 {strides = array<i32>} : memref<1x8x256xf32, #tpu.memory_space<vmem>>, vector<1x8x256xf32>,
    return
  }
  func.func @transform_0(%arg0: i32, %arg1: i32) -> (i32, i32, i32) {
    %c0_i32 = arith.constant 0 : i32
    %c0_i32_0 = arith.constant 0 : i32
    return %arg0, %c0_i32, %arg1 : i32, i32, i32
  }
  func.func @transform_1(%arg0: i32, %arg1: i32) -> (i32, i32) {
    %c0_i32 = arith.constant 0 : i32
    %c0_i32_0 = arith.constant 0 : i32
    %c0_i32_1 = arith.constant 0 : i32
    return %c0_i32, %c0_i32_0 : i32, i32
  }
  func.func @transform_2(%arg0: i32, %arg1: i32) -> (i32, i32) {
    %c0_i32 = arith.constant 0 : i32
    %c0_i32_0 = arith.constant 0 : i32
    %c0_i32_1 = arith.constant 0 : i32
    return %c0_i32, %c0_i32_0 : i32, i32
  }
  func.func @transform_3(%arg0: i32, %arg1: i32) -> (i32, i32, i32) {
    %c0_i32 = arith.constant 0 : i32
    %c0_i32_0 = arith.constant 0 : i32
    %c0_i32_1 = arith.constant 0 : i32
    return %arg0, %c0_i32, %c0_i32_0 : i32, i32, i32
  }
  func.func @transform_4(%arg0: i32, %arg1: i32) -> (i32, i32, i32) {
    %c0_i32 = arith.constant 0 : i32
    %c0_i32_0 = arith.constant 0 : i32
    return %arg0, %c0_i32, %arg1 : i32, i32, i32
  }
}

</mosaic_0001>

<llo_original>
// kernel: moe_layer_forward.1
$region0: #{moe_layer_forward.1}
  #allocation0 [shape = 'u32[]', space=smem, size = 0x4, offset = 0x4, fixed_abs, tag = 'smem constant byte address 0x4 - core index']
  #allocation1 [shape = 'u32[144,128]{1,0:T(1,128)}', space=vmem, size = 0x12000, scoped, tag = 'internal scratch']
  %s0 = inlined_call_operand.vmem [shape: bf16[2,128,256], index: 0, kind: input, shape index: {}]
  %s1 = inlined_call_operand.vmem [shape: bf16[8,128], index: 1, kind: input, shape index: {}]
  %s2 = inlined_call_operand.vmem [shape: f32[8,1], index: 2, kind: input, shape index: {}]
  %s3 = inlined_call_operand.vmem [shape: f32[2,8,1], index: 3, kind: input, shape index: {}]
  %s4 = inlined_call_operand.vmem [shape: f32[2,8,256], index: 4, kind: output, shape index: {}]
  %s5 = sld [smem:[#allocation0]]
  $region49: #{moe_layer_forward.1} parent=0
    _
  %s7 = ssub.s32 1, %s5
  %s8 = scalar_select 0, %s7, %s5
  loop: start=0, step=1, limit=4
  $region2: #{moe_layer_forward.1} parent=0 // loop_pre_header
    _
  $region3: #{moe_layer_forward.1} parent=0 // loop_header
    %s10 = sphi 0, %s14
    %p11 = scmp.ge.s32.totalorder %s10, 4
    %s17 = sphi 0, %s29
    %s18 = sphi 0, %s25
    %s19 = sphi 0, %s17
    %s20 = sphi 0, %s18
    %s21 = sphi 0, %s19
    %s22 = sphi 0, %s20
    %s34 = sphi 0, %s36
    %s37 = sphi 0, %s34
    %s38 = sphi 0, %s37
    %s54 = sphi 0, %s38
    %s58 = sphi 0, %s58
    %s60 = sphi 0, %s58
    %s61 = sphi 0, %s60
    %s75 = sphi 0, %s61
    %s79 = sphi 0, %s79
    %s81 = sphi 0, %s79
    %s82 = sphi 0, %s81
    %s96 = sphi 0, %s82
    %s102 = sphi 0, %s104
    %s105 = sphi 0, %s102
    %s106 = sphi 0, %s105
    %s122 = sphi 0, %s106
    %s130 = sphi 0, %s132
    %s133 = sphi 0, %s130
    %s134 = sphi 0, %s133
    %s150 = sphi 0, %s134
  $region4: #{moe_layer_forward.1} parent=0 // loop_header_branch
    %13 = sbr.rel (%p11) target = $region8
  $region5: #{moe_layer_forward.1} parent=0 // loop_body
    %s15 = ssub.s32 %s10, 1
    %s16 = ssub.s32 %s10, 2
    %s23 = sadd.s32 1, %s18
    %p24 = scmp.ge.s32.totalorder %s23, 1
    %s25 = scalar_select %p24, 0, %s23
    %s26 = sadd.s32 1, %s17
    %s27 = scalar_select %p24, %s26, %s17
    %p28 = scmp.ge.s32.totalorder %s27, 2
    %s29 = scalar_select %p28, 0, %s27
    %s30 = ssub.s32 %s17, %s29
    %s31 = ssub.s32 %s18, %s25
    %s32 = sor.u32 %s30, %s31
    %p33 = scmp.eq.s32.totalorder %s32, 0
    %s35 = sadd.s32 %s34, 1
    %s36 = scalar_select %p33, %s34, %s35
    %p39 = pneg %p33
    %p40 = scmp.eq.s32.totalorder %s10, 1
    %p41 = por %p39, %p40
    %p42 = scmp.ne.s32.totalorder %s34, %s37
    %p43 = scmp.eq.s32.totalorder %s10, 0
    %p44 = por %p42, %p43
    %p45 = scmp.ne.s32.totalorder %s34, %s37
    %p46 = scmp.eq.s32.totalorder %s15, 1
    %p47 = por %p45, %p46
    %p48 = scmp.ne.s32.totalorder %s37, %s38
    %p49 = scmp.eq.s32.totalorder %s15, 0
    %p50 = por %p48, %p49
    %p51 = scmp.ne.s32.totalorder %s37, %s38
    %p52 = scmp.eq.s32.totalorder %s16, 1
    %p53 = por %p51, %p52
    %p55 = scmp.ne.s32.totalorder %s38, %s54
    %p56 = scmp.eq.s32.totalorder %s16, 0
    %p57 = por %p55, %p56
    %s59 = sadd.s32 %s58, 1
    %p62 = scmp.eq.s32.totalorder %s10, 1
    %p63 = scmp.ne.s32.totalorder %s58, %s60
    %p64 = scmp.eq.s32.totalorder %s10, 0
    %p65 = por %p63, %p64
    %p66 = scmp.ne.s32.totalorder %s58, %s60
    %p67 = scmp.eq.s32.totalorder %s15, 1
    %p68 = por %p66, %p67
    %p69 = scmp.ne.s32.totalorder %s60, %s61
    %p70 = scmp.eq.s32.totalorder %s15, 0
    %p71 = por %p69, %p70
    %p72 = scmp.ne.s32.totalorder %s60, %s61
    %p73 = scmp.eq.s32.totalorder %s16, 1
    %p74 = por %p72, %p73
    %p76 = scmp.ne.s32.totalorder %s61, %s75
    %p77 = scmp.eq.s32.totalorder %s16, 0
    %p78 = por %p76, %p77
    %s80 = sadd.s32 %s79, 1
    %p83 = scmp.eq.s32.totalorder %s10, 1
    %p84 = scmp.ne.s32.totalorder %s79, %s81
    %p85 = scmp.eq.s32.totalorder %s10, 0
    %p86 = por %p84, %p85
    %p87 = scmp.ne.s32.totalorder %s79, %s81
    %p88 = scmp.eq.s32.totalorder %s15, 1
    %p89 = por %p87, %p88
    %p90 = scmp.ne.s32.totalorder %s81, %s82
    %p91 = scmp.eq.s32.totalorder %s15, 0
    %p92 = por %p90, %p91
    %p93 = scmp.ne.s32.totalorder %s81, %s82
    %p94 = scmp.eq.s32.totalorder %s16, 1
    %p95 = por %p93, %p94
    %p97 = scmp.ne.s32.totalorder %s82, %s96
    %p98 = scmp.eq.s32.totalorder %s16, 0
    %p99 = por %p97, %p98
    %s100 = ssub.s32 %s17, %s29
    %p101 = scmp.eq.s32.totalorder %s100, 0
    %s103 = sadd.s32 %s102, 1
    %s104 = scalar_select %p101, %s102, %s103
    %p107 = pneg %p101
    %p108 = scmp.eq.s32.totalorder %s10, 1
    %p109 = por %p107, %p108
    %p110 = scmp.ne.s32.totalorder %s102, %s105
    %p111 = scmp.eq.s32.totalorder %s10, 0
    %p112 = por %p110, %p111
    %p113 = scmp.ne.s32.totalorder %s102, %s105
    %p114 = scmp.eq.s32.totalorder %s15, 1
    %p115 = por %p113, %p114
    %p116 = scmp.ne.s32.totalorder %s105, %s106
    %p117 = scmp.eq.s32.totalorder %s15, 0
    %p118 = por %p116, %p117
    %p119 = scmp.ne.s32.totalorder %s105, %s106
    %p120 = scmp.eq.s32.totalorder %s16, 1
    %p121 = por %p119, %p120
    %p123 = scmp.ne.s32.totalorder %s106, %s122
    %p124 = scmp.eq.s32.totalorder %s16, 0
    %p125 = por %p123, %p124
    %s126 = ssub.s32 %s17, %s29
    %s127 = ssub.s32 %s18, %s25
    %s128 = sor.u32 %s126, %s127
    %p129 = scmp.eq.s32.totalorder %s128, 0
    %s131 = sadd.s32 %s130, 1
    %s132 = scalar_select %p129, %s130, %s131
    %p135 = pneg %p129
    %p136 = scmp.eq.s32.totalorder %s10, 1
    %p137 = por %p135, %p136
    %p138 = scmp.ne.s32.totalorder %s130, %s133
    %p139 = scmp.eq.s32.totalorder %s10, 0
    %p140 = por %p138, %p139
    %p141 = scmp.ne.s32.totalorder %s130, %s133
    %p142 = scmp.eq.s32.totalorder %s15, 1
    %p143 = por %p141, %p142
    %p144 = scmp.ne.s32.totalorder %s133, %s134
    %p145 = scmp.eq.s32.totalorder %s15, 0
    %p146 = por %p144, %p145
    %p147 = scmp.ne.s32.totalorder %s133, %s134
    %p148 = scmp.eq.s32.totalorder %s16, 1
    %p149 = por %p147, %p148
    %p151 = scmp.ne.s32.totalorder %s134, %s150
    %p152 = scmp.eq.s32.totalorder %s16, 0
    %p153 = por %p151, %p152
    %p154 = scmp.le.s32.totalorder 1, %s10
    %p155 = scmp.lt.s32.totalorder %s10, 3
    %p156 = pnand %p154, %p155
    %p157 = pneg %p156
    // Predicated region
    $region9: #{moe_layer_forward.1} parent=5 // pred_check
      _
    $region10: #{moe_layer_forward.1} parent=5 // pred_check_branch
      %159 = sbr.rel (%p156) target = $region12
    $region11: #{moe_layer_forward.1} parent=5 // pred_region
      %s160 = ssub.s32 %s10, 1
      // Predicated region
      $region13: #{moe_layer_forward.1} parent=11 // pred_check
        %p161 = pneg %p71
      $region14: #{moe_layer_forward.1} parent=11 // pred_check_branch
        %163 = sbr.rel (%p161) target = $region16
      $region15: #{moe_layer_forward.1} parent=11 // pred_region
        _
      $region16: #{moe_layer_forward.1} parent=11 // pred_fallthru
        _
      // Predicated region
      $region17: #{moe_layer_forward.1} parent=11 // pred_check
        %p164 = pneg %p92
      $region18: #{moe_layer_forward.1} parent=11 // pred_check_branch
        %166 = sbr.rel (%p164) target = $region20
      $region19: #{moe_layer_forward.1} parent=11 // pred_region
        _
      $region20: #{moe_layer_forward.1} parent=11 // pred_fallthru
        _
    $region12: #{moe_layer_forward.1} parent=5 // pred_fallthru
      _
    %p167 = scmp.lt.s32.totalorder %s10, 2
    // Predicated region
    $region21: #{moe_layer_forward.1} parent=5 // pred_check
      %p168 = pneg %p167
    $region22: #{moe_layer_forward.1} parent=5 // pred_check_branch
      %170 = sbr.rel (%p168) target = $region24
    $region23: #{moe_layer_forward.1} parent=5 // pred_region
      // Predicated region
      $region25: #{moe_layer_forward.1} parent=23 // pred_check
        %p171 = pneg %p44
      $region26: #{moe_layer_forward.1} parent=23 // pred_check_branch
        %173 = sbr.rel (%p171) target = $region28
      $region27: #{moe_layer_forward.1} parent=23 // pred_region
        %s174 = smul.u32 2, %s18
        %p175 = scmp.lt.s32.totalorder %s17, 1
        %s176 = scalar_select %p175, %s17, 1
        %p177 = scmp.lt.s32.totalorder %s174, 1
        %s178 = scalar_select %p177, %s174, 1
        %s179 = smul.addr %s176, 32
        %s180 = sadd.s32 %s178, %s179
        %s181 = smul.addr %s180, 4
        %s182 = scalar_lea.vmem %s0, %s181
        %s183 = smul.u32 2, %s18
      $region28: #{moe_layer_forward.1} parent=23 // pred_fallthru
        _
      // Predicated region
      $region29: #{moe_layer_forward.1} parent=23 // pred_check
        %p184 = pneg %p112
      $region30: #{moe_layer_forward.1} parent=23 // pred_check_branch
        %186 = sbr.rel (%p184) target = $region32
      $region31: #{moe_layer_forward.1} parent=23 // pred_region
        %p187 = scmp.lt.s32.totalorder %s17, 1
        %s188 = scalar_select %p187, %s17, 1
        %s189 = smul.addr %s188, 8
        %s190 = scalar_lea.vmem %s3, %s189
      $region32: #{moe_layer_forward.1} parent=23 // pred_fallthru
        _
    $region24: #{moe_layer_forward.1} parent=5 // pred_fallthru
      _
    %p191 = scmp.le.s32.totalorder 1, %s10
    %p192 = scmp.lt.s32.totalorder %s10, 3
    %p193 = pnand %p191, %p192
    %p194 = pneg %p193
    // Predicated region
    $region33: #{moe_layer_forward.1} parent=5 // pred_check
      _
    $region34: #{moe_layer_forward.1} parent=5 // pred_check_branch
      %196 = sbr.rel (%p193) target = $region36
    $region35: #{moe_layer_forward.1} parent=5 // pred_region
      %s197 = ssub.s32 %s10, 1
      %s198 = smul.u32 2, %s20
      %p199 = scmp.lt.s32.totalorder %s19, 1
      %s200 = scalar_select %p199, %s19, 1
      %p201 = scmp.lt.s32.totalorder %s198, 1
      %s202 = scalar_select %p201, %s198, 1
      %s203 = smul.addr %s200, 32
      %s204 = sadd.s32 %s202, %s203
      %s205 = smul.addr %s204, 4
      %s206 = scalar_lea.vmem %s0, %s205
      %p207 = pneg %p50
      %p208 = pneg %p47
      %p209 = pneg %p71
      %p210 = pneg %p68
      %p211 = pneg %p92
      %p212 = pneg %p89
      %p213 = scmp.lt.s32.totalorder %s19, 1
      %s214 = scalar_select %p213, %s19, 1
      %s215 = smul.addr %s214, 8
      %s216 = scalar_lea.vmem %s3, %s215
      %p217 = pneg %p118
      %p218 = pneg %p115
      %p219 = pneg %p146
      %p220 = pneg %p143
      %s221 = smul.u32 2, %s20
      %p222 = scmp.lt.s32.totalorder %s19, 1
      %s223 = scalar_select %p222, %s19, 1
      %p224 = scmp.lt.s32.totalorder %s221, 1
      %s225 = scalar_select %p224, %s221, 1
      %s226 = smul.addr %s223, 2
      %s227 = sadd.s32 %s225, %s226
      %s228 = smul.addr %s227, 8
      %s229 = scalar_lea.vmem %s4, %s228
      %s230 = smul.u32 2, %s20
      %p231 = scmp.lt.s32.totalorder %s19, 1
      %s232 = scalar_select %p231, %s19, 1
      %p233 = scmp.lt.s32.totalorder %s230, 1
      %s234 = scalar_select %p233, %s230, 1
      %s235 = smul.addr %s232, 32
      %s236 = sadd.s32 %s234, %s235
      %s237 = smul.addr %s236, 4
      %s238 = scalar_lea.vmem %s0, %s237
      %s239 = smul.u32 2, %s20
      %p240 = scmp.lt.s32.totalorder %s19, 1
      %s241 = scalar_select %p240, %s19, 1
      %s242 = smul.addr %s241, 8
      %s243 = scalar_lea.vmem %s3, %s242
      %s244 = smul.u32 2, %s20
      %p245 = scmp.lt.s32.totalorder %s19, 1
      %s246 = scalar_select %p245, %s19, 1
      %p247 = scmp.lt.s32.totalorder %s244, 1
      %s248 = scalar_select %p247, %s244, 1
      %s249 = smul.addr %s246, 2
      %s250 = sadd.s32 %s248, %s249
      %s251 = smul.addr %s250, 8
      %s252 = scalar_lea.vmem %s4, %s251
      %s253 = smul.u32 2, %s20
      %v255 = vld [vmem:[%s1] sm:$0xf]
      %v256 = vld [vmem:[%s238] sm:$0xff]
      %v257 = vld [vmem:[%s238 + $0x8] sm:$0xff]
      %v258 = vld [vmem:[%s238 + $0x10] sm:$0xff]
      %v259 = vld [vmem:[%s238 + $0x18] sm:$0xff]
      %v260 = vld [vmem:[%s238 + $0x20] sm:$0xff]
      %v261 = vld [vmem:[%s238 + $0x28] sm:$0xff]
      %v262 = vld [vmem:[%s238 + $0x30] sm:$0xff]
      %v263 = vld [vmem:[%s238 + $0x38] sm:$0xff]
      %v264 = vld [vmem:[%s238 + $0x40] sm:$0xff]
      %v265 = vld [vmem:[%s238 + $0x48] sm:$0xff]
      %v266 = vld [vmem:[%s238 + $0x50] sm:$0xff]
      %v267 = vld [vmem:[%s238 + $0x58] sm:$0xff]
      %v268 = vld [vmem:[%s238 + $0x60] sm:$0xff]
      %v269 = vld [vmem:[%s238 + $0x68] sm:$0xff]
      %v270 = vld [vmem:[%s238 + $0x70] sm:$0xff]
      %v271 = vld [vmem:[%s238 + $0x78] sm:$0xff]
      %v272 = vld [vmem:[%s2] sm:$0xff]
      %274 = vset.pattern.permute.xlu0 0
      %275 = vperm.xlu0 %274, %v272
      %v276 = vpop.permute.xlu0 %275
      %v294 = vunpack.c.l.b16 %v256
      %v295 = vunpack.c.h.b16 %v256
      %v296 = vunpack.c.l.b16 %v257
      %v297 = vunpack.c.h.b16 %v257
      %v298 = vunpack.c.l.b16 %v258
      %v299 = vunpack.c.h.b16 %v258
      %v300 = vunpack.c.l.b16 %v259
      %v301 = vunpack.c.h.b16 %v259
      %v302 = vunpack.c.l.b16 %v260
      %v303 = vunpack.c.h.b16 %v260
      %v304 = vunpack.c.l.b16 %v261
      %v305 = vunpack.c.h.b16 %v261
      %v306 = vunpack.c.l.b16 %v262
      %v307 = vunpack.c.h.b16 %v262
      %v308 = vunpack.c.l.b16 %v263
      %v309 = vunpack.c.h.b16 %v263
      %v310 = vunpack.c.l.b16 %v264
      %v311 = vunpack.c.h.b16 %v264
      %v312 = vunpack.c.l.b16 %v265
      %v313 = vunpack.c.h.b16 %v265
      %v314 = vunpack.c.l.b16 %v266
      %v315 = vunpack.c.h.b16 %v266
      %v316 = vunpack.c.l.b16 %v267
      %v317 = vunpack.c.h.b16 %v267
      %v318 = vunpack.c.l.b16 %v268
      %v319 = vunpack.c.h.b16 %v268
      %v320 = vunpack.c.l.b16 %v269
      %v321 = vunpack.c.h.b16 %v269
      %v322 = vunpack.c.l.b16 %v270
      %v323 = vunpack.c.h.b16 %v270
      %v324 = vunpack.c.l.b16 %v271
      %v325 = vunpack.c.h.b16 %v271
      %v326 = vpack.c.b16 %v296, %v294
      %v327 = vpack.c.b16 %v297, %v295
      %v328 = vpack.c.b16 %v300, %v298
      %v329 = vpack.c.b16 %v301, %v299
      %v330 = vpack.c.b16 %v304, %v302
      %v331 = vpack.c.b16 %v305, %v303
      %v332 = vpack.c.b16 %v308, %v306
      %v333 = vpack.c.b16 %v309, %v307
      %v334 = vpack.c.b16 %v312, %v310
      %v335 = vpack.c.b16 %v313, %v311
      %v336 = vpack.c.b16 %v316, %v314
      %v337 = vpack.c.b16 %v317, %v315
      %v338 = vpack.c.b16 %v320, %v318
      %v339 = vpack.c.b16 %v321, %v319
      %v340 = vpack.c.b16 %v324, %v322
      %v341 = vpack.c.b16 %v325, %v323
      %358 = vmatprep.subr.bf16.mxu0 %v327
      %359 = vmatpush1.bf16.msra.mxu0 %v326
      %360 = vmatprep.subr.bf16.mxu0 %v329
      %361 = vmatpush1.bf16.msra.mxu0 %v328
      %362 = vmatprep.subr.bf16.mxu0 %v331
      %363 = vmatpush1.bf16.msra.mxu0 %v330
      %364 = vmatprep.subr.bf16.mxu0 %v333
      %365 = vmatpush1.bf16.msra.mxu0 %v332
      %366 = vmatprep.subr.bf16.mxu0 %v335
      %367 = vmatpush1.bf16.msra.mxu0 %v334
      %368 = vmatprep.subr.bf16.mxu0 %v337
      %369 = vmatpush1.bf16.msra.mxu0 %v336
      %370 = vmatprep.subr.bf16.mxu0 %v339
      %371 = vmatpush1.bf16.msra.mxu0 %v338
      %372 = vmatprep.subr.bf16.mxu0 %v341
      %373 = vmatpush1.bf16.msra.mxu0 %v340
      %374 = vmatprep.subr.bf16.mxu0 0
      %375 = vmatpush1.bf16.msra.mxu0 0
      %376 = vmatprep.subr.bf16.mxu0 0
      %377 = vmatpush1.bf16.msra.mxu0 0
      %378 = vmatprep.subr.bf16.mxu0 0
      %379 = vmatpush1.bf16.msra.mxu0 0
      %380 = vmatprep.subr.bf16.mxu0 0
      %381 = vmatpush1.bf16.msra.mxu0 0
      %382 = vmatprep.subr.bf16.mxu0 0
      %383 = vmatpush1.bf16.msra.mxu0 0
      %384 = vmatprep.subr.bf16.mxu0 0
      %385 = vmatpush1.bf16.msra.mxu0 0
      %386 = vmatprep.subr.bf16.mxu0 0
      %387 = vmatpush1.bf16.msra.mxu0 0
      %388 = vmatprep.subr.bf16.mxu0 0
      %389 = vmatpush1.bf16.msra.mxu0 0
      %390 = vmatprep.mubr.bf16.mxu0 0
      %391 = vmatmul.mubr.bf16.gmra.mrb[0].mxu0 %v255
      %v392 = vpop.f32.mrb[0].mxu0
      %v393 = vadd.f32 %v276, %v392
      %v394 = vpop.f32.mrb[0].mxu0
      %v395 = vadd.f32 %v276, %v394
      %v396 = vpop.f32.mrb[0].mxu0
      %v397 = vpop.f32.mrb[0].mxu0
      %398 = vdwg.mxu0
      %v399 = vld [vmem:[%s243] sm:$0xff]
      %401 = vset.pattern.permute.xlu0 0
      %402 = vperm.xlu0 %401, %v399
      %v403 = vpop.permute.xlu0 %402
      %v405 = vmul.f32 %v393, %v403
      %v406 = vmul.f32 %v395, %v403
      %407 = vst [vmem:[%s252] sm:$0xff] %v405
      %408 = vst [vmem:[%s252 + $0x8] sm:$0xff] %v406
      %s409 = smul.u32 2, %s20
      %p410 = scmp.lt.s32.totalorder %s19, 1
      %s411 = scalar_select %p410, %s19, 1
      %p412 = scmp.lt.s32.totalorder %s409, 1
      %s413 = scalar_select %p412, %s409, 1
      %s414 = smul.addr %s411, 2
      %s415 = sadd.s32 %s413, %s414
      %s416 = smul.addr %s415, 8
      %s417 = scalar_lea.vmem %s4, %s416
      // Predicated region
      $region37: #{moe_layer_forward.1} parent=35 // pred_check
        %p418 = pneg %p143
      $region38: #{moe_layer_forward.1} parent=35 // pred_check_branch
        %420 = sbr.rel (%p418) target = $region40
      $region39: #{moe_layer_forward.1} parent=35 // pred_region
        %s421 = smul.u32 2, %s20
      $region40: #{moe_layer_forward.1} parent=35 // pred_fallthru
        _
    $region36: #{moe_layer_forward.1} parent=5 // pred_fallthru
      _
    %p422 = scmp.le.s32.totalorder 2, %s10
    // Predicated region
    $region41: #{moe_layer_forward.1} parent=5 // pred_check
      %p423 = pneg %p422
    $region42: #{moe_layer_forward.1} parent=5 // pred_check_branch
      %425 = sbr.rel (%p423) target = $region44
    $region43: #{moe_layer_forward.1} parent=5 // pred_region
      %s426 = ssub.s32 %s10, 2
      // Predicated region
      $region45: #{moe_layer_forward.1} parent=43 // pred_check
        %p427 = pneg %p149
      $region46: #{moe_layer_forward.1} parent=43 // pred_check_branch
        %429 = sbr.rel (%p427) target = $region48
      $region47: #{moe_layer_forward.1} parent=43 // pred_region
        %s430 = smul.u32 2, %s22
        %p431 = scmp.lt.s32.totalorder %s21, 1
        %s432 = scalar_select %p431, %s21, 1
        %p433 = scmp.lt.s32.totalorder %s430, 1
        %s434 = scalar_select %p433, %s430, 1
        %s435 = smul.addr %s432, 2
        %s436 = sadd.s32 %s434, %s435
        %s437 = smul.addr %s436, 8
        %s438 = scalar_lea.vmem %s4, %s437
      $region48: #{moe_layer_forward.1} parent=43 // pred_fallthru
        _
    $region44: #{moe_layer_forward.1} parent=5 // pred_fallthru
      _
  $region6: #{moe_layer_forward.1} parent=0 // loop_footer
    %s14 = sadd.s32 1, %s10
  $region7: #{moe_layer_forward.1} parent=0 // loop_footer_branch
    %9 = sbr.rel target = $region3
  $region8: #{moe_layer_forward.1} parent=0 // loop_exit
    _

</llo_original>
